<compile_context>
chip_gen: v6e
topology: v6e:2x2x1
jax: 0.10.0
libtpu: 0.0.40
codegen_flags: <defaults>
</compile_context>

<pallas_src>
import jax
import jax.numpy as jnp
from jax import lax
from jax.experimental import pallas as pl
from jax.experimental.pallas import tpu as pltpu


def _round_up(x, m):
    return ((x + m - 1) // m) * m


def _largest_divisor_leq(n, cap):
    for c in range(min(n, cap), 0, -1):
        if n % c == 0:
            return c
    return 1


# -------------------- linear kernel (embedding-table projection) --------------
def _linear_kernel(x_ref, w_ref, b_ref, o_ref):
    o_ref[...] = (jnp.dot(x_ref[...], w_ref[...],
                          preferred_element_type=jnp.float32)
                  + b_ref[...])


def linear_forward(x, w, b, *, row_block=512):
    """x: (N, K) f32; w: (K, M); b: (1, M).  M must be a multiple of 128."""
    N, K = x.shape
    M = w.shape[1]
    Np = _round_up(N, 8)
    rb = Np if Np <= row_block else row_block
    Np = _round_up(Np, rb)
    if Np != N:
        x = jnp.pad(x, ((0, Np - N), (0, 0)))
    out = pl.pallas_call(
        _linear_kernel,
        out_shape=jax.ShapeDtypeStruct((Np, M), jnp.float32),
        grid=(Np // rb,),
        in_specs=[pl.BlockSpec((rb, K), lambda i: (i, 0)),
                  pl.BlockSpec((K, M), lambda i: (0, 0)),
                  pl.BlockSpec((1, M), lambda i: (0, 0))],
        out_specs=pl.BlockSpec((rb, M), lambda i: (i, 0)),
        compiler_params=pltpu.CompilerParams(dimension_semantics=("parallel",)),
    )(x, w, b)
    return out[:N]


# -------------------- RNN recurrence + fused FC kernel -------------------------
def _make_rnn_fc_kernel(Tc, Bc, Hp, Op, mxu_dtype):
    def kernel(xproj_ref, h0_ref, whh_ref, wfc_ref, bfc_ref,
               out_ref, hN_ref, h_carry, h_chunk):
        t_blk = pl.program_id(1)

        @pl.when(t_blk == 0)
        def _():
            h_carry[...] = h0_ref[...]

        # Weights hoisted out of the step loop; they are VMEM-resident anyway
        # (constant index maps) but this avoids re-reading/casting per step.
        whh = whh_ref[...].astype(mxu_dtype)

        def step(i, h):
            # x-projection (incl. both biases) was precomputed outside.
            pre = xproj_ref[i] + jnp.dot(h.astype(mxu_dtype), whh,
                                         preferred_element_type=jnp.float32)
            h_new = jnp.tanh(pre)              # f32 elementwise (v5e-safe, EUP)
            h_chunk[i] = h_new
            return h_new

        h = lax.fori_loop(0, Tc, step, h_carry[...], unroll=True)
        h_carry[...] = h

        # Fused FC epilogue: one MXU matmul over the whole time-chunk and one
        # lane-dense (Op % 128 == 0) slab store per grid step.
        hc = h_chunk[...].reshape(Tc * Bc, Hp)
        logits = (jnp.dot(hc.astype(mxu_dtype), wfc_ref[...].astype(mxu_dtype),
                          preferred_element_type=jnp.float32)
                  + bfc_ref[...])
        out_ref[...] = logits.reshape(Tc, Bc, Op)

        @pl.when(t_blk == pl.num_programs(1) - 1)
        def _():
            hN_ref[...] = h

    return kernel


def rnn_fc_forward(xproj_tbh, h0_bh, whh, wfc, bfc, *, time_chunk=32,
                   mxu_dtype=jnp.float32):
    """xproj_tbh: (T, Bp, Hp) time-major precomputed x@W_ih + (b_ih+b_hh);
    h0_bh: (Bp, Hp).  Returns (logits (T, Bp, Op), h_last (Bp, Hp))."""
    T, Bp, Hp = xproj_tbh.shape
    Op = wfc.shape[1]
    Tc = _largest_divisor_leq(T, time_chunk)   # timesteps per grid step
    Bc = Bp if Bp <= 256 else 128              # batch tile (wrapper pads Bp to match)
    assert Bp % Bc == 0 and T % Tc == 0
    nb, nt = Bp // Bc, T // Tc

    kernel = _make_rnn_fc_kernel(Tc, Bc, Hp, Op, mxu_dtype)
    logits, h_last = pl.pallas_call(
        kernel,
        out_shape=(jax.ShapeDtypeStruct((T, Bp, Op), jnp.float32),
                   jax.ShapeDtypeStruct((Bp, Hp), jnp.float32)),
        grid=(nb, nt),
        in_specs=[
            pl.BlockSpec((Tc, Bc, Hp), lambda b, t: (t, b, 0)),   # x-projection chunk
            pl.BlockSpec((Bc, Hp),     lambda b, t: (b, 0)),      # h0
            pl.BlockSpec((Hp, Hp),     lambda b, t: (0, 0)),      # W_hh^T (resident)
            pl.BlockSpec((Hp, Op),     lambda b, t: (0, 0)),      # W_fc^T (resident)
            pl.BlockSpec((1, Op),      lambda b, t: (0, 0)),      # b_fc
        ],
        out_specs=(
            pl.BlockSpec((Tc, Bc, Op), lambda b, t: (t, b, 0)),   # per-chunk logits
            pl.BlockSpec((Bc, Hp),     lambda b, t: (b, 0)),      # final hidden
        ),
        scratch_shapes=[pltpu.VMEM((Bc, Hp), jnp.float32),        # hidden carry
                        pltpu.VMEM((Tc, Bc, Hp), jnp.float32)],   # chunk hidden buf
        compiler_params=pltpu.CompilerParams(
            dimension_semantics=("parallel", "arbitrary")),       # batch ||, time serial
    )(xproj_tbh, h0_bh, whh, wfc, bfc)
    return logits, h_last


# ------------------------------ CharRNN ---------------------------------------
class CharRNNPallas:
    """Pallas/TPU port of the PyTorch CharRNN forward pass (num_layers=1)."""

    def __init__(self, input_size, embedding_size, hidden_size, output_size,
                 num_layers=1, key=None, mxu_dtype=jnp.float32):
        assert num_layers == 1  # TODO(synk): multi-layer RNN stacking not implemented
        self.input_size = input_size
        self.embedding_size = embedding_size
        self.hidden_size = hidden_size
        self.output_size = output_size
        self.num_layers = num_layers
        self.mxu_dtype = mxu_dtype      # set jnp.bfloat16 on v6e/v7x for MXU speed

        key = jax.random.PRNGKey(0) if key is None else key
        k = jax.random.split(key, 7)
        s = 1.0 / jnp.sqrt(hidden_size)
        # Embedding: N(0,1) like nn.Embedding default.
        self.emb = jax.random.normal(k[0], (input_size, embedding_size), jnp.float32)
        # RNN weights stored pre-transposed (in_features, out_features).
        self.w_ih_t = jax.random.uniform(k[1], (embedding_size, hidden_size),
                                         jnp.float32, -s, s)
        self.w_hh_t = jax.random.uniform(k[2], (hidden_size, hidden_size),
                                         jnp.float32, -s, s)
        self.b_ih = jax.random.uniform(k[3], (1, hidden_size), jnp.float32, -s, s)
        self.b_hh = jax.random.uniform(k[4], (1, hidden_size), jnp.float32, -s, s)
        # Linear (fc), pre-transposed.
        self.w_fc_t = jax.random.uniform(k[5], (hidden_size, output_size),
                                         jnp.float32, -s, s)
        self.b_fc = jax.random.uniform(k[6], (1, output_size), jnp.float32, -s, s)

        # Lane-dense padded views for the kernels (zero padding is exact).
        H, O = hidden_size, output_size
        self.Hp = _round_up(H, 128)
        self.Op = _round_up(O, 128)
        self.w_ih_t_p = jnp.pad(self.w_ih_t, ((0, 0), (0, self.Hp - H)))
        self.b_comb_p = jnp.pad(self.b_ih + self.b_hh, ((0, 0), (0, self.Hp - H)))
        self.w_hh_t_p = jnp.pad(self.w_hh_t, ((0, self.Hp - H), (0, self.Hp - H)))
        self.w_fc_t_p = jnp.pad(self.w_fc_t, ((0, self.Hp - H), (0, self.Op - O)))
        self.b_fc_p = jnp.pad(self.b_fc, ((0, 0), (0, self.Op - O)))

    def init_hidden(self, batch_size):
        return jnp.zeros((self.num_layers, batch_size, self.hidden_size),
                         jnp.float32)

    def __call__(self, tokens, hidden):
        # tokens: (B, T) int32; hidden: (num_layers=1, B, H)
        B, T = tokens.shape
        H, O, Hp = self.hidden_size, self.output_size, self.Hp

        # 1) Input projection hoisted out of the recurrence: project the tiny
        #    embedding table once through W_ih (+ folded biases) with a Pallas
        #    linear kernel, then gather per-token rows directly in TIME-MAJOR
        #    order (no big-activation transpose).
        table = linear_forward(self.emb, self.w_ih_t_p, self.b_comb_p)  # (V, Hp)
        xproj = jnp.take(table, tokens.T, axis=0)                       # (T, B, Hp) glue gather

        # 2) Pad batch to a sublane multiple (padded rows are discarded later);
        #    keep Bp a multiple of the 128-row batch tile when it exceeds 256.
        Bp = _round_up(B, 8)
        Bp = _round_up(Bp, 128) if Bp > 256 else Bp
        if Bp != B:
            xproj = jnp.pad(xproj, ((0, 0), (0, Bp - B), (0, 0)))
        h0 = jnp.zeros((Bp, Hp), jnp.float32).at[:B, :H].set(hidden[0])

        # 3) Serial recurrence + fused FC (Pallas).
        logits_tbo, hN = rnn_fc_forward(xproj, h0, self.w_hh_t_p,
                                        self.w_fc_t_p, self.b_fc_p,
                                        mxu_dtype=self.mxu_dtype)

        # 4) Reorder/slice on the small logits, matching PyTorch's
        #    batch_first reshape(B*T, O) row ordering.
        logits = jnp.transpose(logits_tbo, (1, 0, 2))[:B, :, :O].reshape(B * T, O)
        hidden_out = hN[:B, :H][None]                                   # (1, B, H)
        return logits, hidden_out


# ------------------------------ reference --------------------------------------
def _reference(model, tokens, hidden):
    embedded = jnp.take(model.emb, tokens, axis=0)             # (B, T, E)
    B, T, _ = embedded.shape
    h = hidden[0]
    outs = []
    for t in range(T):
        h = jnp.tanh(embedded[:, t] @ model.w_ih_t + model.b_ih
                     + h @ model.w_hh_t + model.b_hh)
        outs.append(h)
    out = jnp.stack(outs, axis=1)                              # (B, T, H)
    logits = out.reshape(B * T, -1) @ model.w_fc_t + model.b_fc
    return logits, h[None]


if __name__ == "__main__":
    input_size = 16        # vocab
    embedding_size = 32
    hidden_size = 32
    output_size = 16
    B, T = 2, 8

    model = CharRNNPallas(input_size, embedding_size, hidden_size, output_size,
                          num_layers=1, key=jax.random.PRNGKey(0))

    tokens = jax.random.randint(jax.random.PRNGKey(0), (B, T), 0, input_size,
                                dtype=jnp.int32)
    hidden0 = model.init_hidden(B)

    logits, hidden_out = model(tokens, hidden0)
    jax.block_until_ready((logits, hidden_out))

    ref_logits, ref_hidden = _reference(model, tokens, hidden0)
    assert logits.shape == (B * T, output_size)
    assert hidden_out.shape == (1, B, hidden_size)
    assert jnp.allclose(logits, ref_logits, atol=1e-4, rtol=1e-4)
    assert jnp.allclose(hidden_out, ref_hidden, atol=1e-4, rtol=1e-4)

    print("KERNEL_OK")
</pallas_src>

<mosaic_0001>
module attributes {stable_mosaic.version = 11 : i64} {
  func.func @_linear_kernel(%arg0: i32, %arg1: memref<16x32xf32, #tpu.memory_space<vmem>>, %arg2: memref<32x128xf32, #tpu.memory_space<vmem>>, %arg3: memref<1x128xf32, #tpu.memory_space<vmem>>, %arg4: memref<16x128xf32, #tpu.memory_space<vmem>>) attributes {dimension_semantics = [#tpu.dimension_semantics<parallel>], iteration_bounds = array<i64: 1>, scalar_prefetch = 0 : i64, scratch_operands = 0 : i64, tpu.core_type = #tpu.core_type<tc>, window_params = [{transform_indices = @transform_0, window_bounds = array<i64: 16, 32>}, {pipeline_mode = #tpu.pipeline_mode<synchronous>, transform_indices = @transform_1, window_bounds = array<i64: 32, 128>}, {pipeline_mode = #tpu.pipeline_mode<synchronous>, transform_indices = @transform_2, window_bounds = array<i64: 1, 128>}, {transform_indices = @transform_3, window_bounds = array<i64: 16, 128>}]} {
    %c0 = arith.constant 0 : index
    %c0_0 = arith.constant 0 : index
    %0 = vector.load %arg1[%c0, %c0_0] : memref<16x32xf32, #tpu.memory_space<vmem>>, vector<16x32xf32>
    %c0_1 = arith.constant 0 : index
    %c0_2 = arith.constant 0 : index
    %1 = vector.load %arg2[%c0_1, %c0_2] : memref<32x128xf32, #tpu.memory_space<vmem>>, vector<32x128xf32>
    %cst = arith.constant dense<0.000000e+00> : vector<16x128xf32>
    %2 = tpu.matmul %0, %1, %cst {dimension_numbers = #tpu.dot_dimension_numbers<[1], [0], [0], [1], [0, 0, 1, 1], [], []>} : vector<16x32xf32>, vector<32x128xf32>, vector<16x128xf32> -> vector<16x128xf32>
    %c0_3 = arith.constant 0 : index
    %c0_4 = arith.constant 0 : index
    %3 = vector.load %arg3[%c0_3, %c0_4] : memref<1x128xf32, #tpu.memory_space<vmem>>, vector<1x128xf32>
    %4 = vector.broadcast %3 : vector<1x128xf32> to vector<16x128xf32>
    %5 = arith.addf %2, %4 : vector<16x128xf32>
    %c0_5 = arith.constant 0 : index
    %c0_6 = arith.constant 0 : index
    %6 = vector.load %arg4[%c0_5, %c0_6] : memref<16x128xf32, #tpu.memory_space<vmem>>, vector<16x128xf32>
    tpu.vector_store %arg4[%c0_5, %c0_6], %5 {strides = array<i32>} : memref<16x128xf32, #tpu.memory_space<vmem>>, vector<16x128xf32>,
    return
  }
  func.func @transform_0(%arg0: i32) -> (i32, i32) {
    %c0_i32 = arith.constant 0 : i32
    %c0_i32_0 = arith.constant 0 : i32
    return %arg0, %c0_i32 : i32, i32
  }
  func.func @transform_1(%arg0: i32) -> (i32, i32) {
    %c0_i32 = arith.constant 0 : i32
    %c0_i32_0 = arith.constant 0 : i32
    %c0_i32_1 = arith.constant 0 : i32
    return %c0_i32, %c0_i32_0 : i32, i32
  }
  func.func @transform_2(%arg0: i32) -> (i32, i32) {
    %c0_i32 = arith.constant 0 : i32
    %c0_i32_0 = arith.constant 0 : i32
    %c0_i32_1 = arith.constant 0 : i32
    return %c0_i32, %c0_i32_0 : i32, i32
  }
  func.func @transform_3(%arg0: i32) -> (i32, i32) {
    %c0_i32 = arith.constant 0 : i32
    %c0_i32_0 = arith.constant 0 : i32
    return %arg0, %c0_i32 : i32, i32
  }
}

</mosaic_0001>

<llo_original>
// kernel: tpu_custom_call.1
$region0: #{tpu_custom_call.1}
  #allocation0 [shape = 'u32[]', space=smem, size = 0x4, offset = 0x4, fixed_abs, tag = 'smem constant byte address 0x4 - core index']
  #allocation1 [shape = 'u32[144,128]{1,0:T(1,128)}', space=vmem, size = 0x12000, scoped, tag = 'internal scratch']
  %s0 = inlined_call_operand.hbm [shape: f32[16,32], index: 0, kind: input, shape index: {}]
  %s1 = inlined_call_operand.hbm [shape: f32[32,128], index: 1, kind: input, shape index: {}]
  %s2 = inlined_call_operand.vmem [shape: f32[1,128], index: 2, kind: input, shape index: {}]
  %s3 = inlined_call_operand.hbm [shape: f32[16,128], index: 3, kind: output, shape index: {}]
  %s4 = sld [smem:[#allocation0]]
  $region30: #{tpu_custom_call.1} parent=0
    _
  %s6 = ssub.s32 1, %s4
  %s7 = scalar_select 0, %s6, %s4
  $region1: #{tpu_custom_call.1} parent=0
    #allocation2 [shape = 'u8[8192]{0}', space=vmem, size = 0x2000, scoped, tag = 'input window, operand 0, single buffered']
    #allocation3 [shape = 's32[1]{0}', space=sflag, size = 0x4, scoped, tag = 'scoped memory for tpu_custom_call.1']
    #allocation4 [shape = 's32[1]{0}', space=sflag, size = 0x4, scoped, tag = 'scoped memory for tpu_custom_call.1']
    #allocation5 [shape = 'u8[16384]{0}', space=vmem, size = 0x4000, scoped, tag = 'input window, operand 1, single buffered']
    #allocation6 [shape = 's32[1]{0}', space=sflag, size = 0x4, scoped, tag = 'scoped memory for tpu_custom_call.1']
    #allocation7 [shape = 'u8[8192]{0}', space=vmem, size = 0x2000, scoped, tag = 'output window, operand 0, single buffered']
    %8 = vsyncpa [#allocation3], 0
    %9 = vsyncpa [#allocation6], 0
    %10 = vsyncpa [#allocation4], 0
    // Predicated region
    $region2: #{tpu_custom_call.1} parent=1 // pred_check
      _
    $region3: #{tpu_custom_call.1} parent=1 // pred_check_branch
      %12 = sbr.rel (0) target = $region5
    $region4: #{tpu_custom_call.1} parent=1 // pred_region
      %s14 = ssub.s32 256, 256
      %15 = vsyncadd [#allocation3], %s14
      %s16 = sshll.u32 [#allocation2], 4
      %s17 = int_to_ptr.vmem [resolvable:$true] %s16
      %22 = dma.hbm_to_vmem [thread:$0]  %s0, 256, %s17, [#allocation3], 128, 128, 8
    $region5: #{tpu_custom_call.1} parent=1 // pred_fallthru
      _
    // Predicated region
    $region6: #{tpu_custom_call.1} parent=1 // pred_check
      _
    $region7: #{tpu_custom_call.1} parent=1 // pred_check_branch
      %24 = sbr.rel (0) target = $region9
    $region8: #{tpu_custom_call.1} parent=1 // pred_region
      %s26 = ssub.s32 512, 512
      %27 = vsyncadd [#allocation6], %s26
      %s28 = sshll.u32 [#allocation5], 4
      %s29 = int_to_ptr.vmem [resolvable:$true] %s28
      %34 = dma.hbm_to_vmem [thread:$0]  %s1, 512, %s29, [#allocation6], 128, 128, 8
    $region9: #{tpu_custom_call.1} parent=1 // pred_fallthru
      _
    // Predicated region
    $region10: #{tpu_custom_call.1} parent=1 // pred_check
      _
    $region11: #{tpu_custom_call.1} parent=1 // pred_check_branch
      %36 = sbr.rel (0) target = $region13
    $region12: #{tpu_custom_call.1} parent=1 // pred_region
      _
    $region13: #{tpu_custom_call.1} parent=1 // pred_fallthru
      _
    // Predicated region
    $region14: #{tpu_custom_call.1} parent=1 // pred_check
      _
    $region15: #{tpu_custom_call.1} parent=1 // pred_check_branch
      %38 = sbr.rel (0) target = $region17
    $region16: #{tpu_custom_call.1} parent=1 // pred_region
      %39 = dma.done [#allocation3], 256
    $region17: #{tpu_custom_call.1} parent=1 // pred_fallthru
      _
    // Predicated region
    $region18: #{tpu_custom_call.1} parent=1 // pred_check
      _
    $region19: #{tpu_custom_call.1} parent=1 // pred_check_branch
      %41 = sbr.rel (0) target = $region21
    $region20: #{tpu_custom_call.1} parent=1 // pred_region
      %42 = dma.done [#allocation6], 512
    $region21: #{tpu_custom_call.1} parent=1 // pred_fallthru
      _
    %v43 = vld [vmem:[#allocation2] sm:$0xff]
    %v44 = vld [vmem:[#allocation2 + $0x8] sm:$0xff]
    %v45 = vld [vmem:[#allocation5] sm:$0xff]
    %v46 = vld [vmem:[#allocation5 + $0x8] sm:$0xff]
    %v47 = vld [vmem:[#allocation5 + $0x10] sm:$0xff]
    %v48 = vld [vmem:[#allocation5 + $0x18] sm:$0xff]
    %v49 = vld [vmem:[%s2] sm:$0x1]
    %v51 = vlaneseq
    %v52 = vshrl.u32 %v51, 7
    %v53 = vsub.s32 0, %v52
    %v54 = vrot.slane %v49, %v53
    %vm56 = vcmask 261120
    %v58 = vsel %vm56, %v43, 0
    %v61 = vsel %vm56, %v44, 0
    %63 = vmatprep.subr.mxu0 0.0
    %64 = vmatpush1.msra.mxu0 0.0
    %65 = vmatprep.subr.mxu0 0.0
    %66 = vmatpush1.msra.mxu0 0.0
    %67 = vmatprep.subr.mxu0 0.0
    %68 = vmatpush1.msra.mxu0 0.0
    %69 = vmatprep.subr.mxu0 0.0
    %70 = vmatpush1.msra.mxu0 0.0
    %71 = vmatprep.subr.mxu0 0.0
    %72 = vmatpush1.msra.mxu0 0.0
    %73 = vmatprep.subr.mxu0 0.0
    %74 = vmatpush1.msra.mxu0 0.0
    %75 = vmatprep.subr.mxu0 0.0
    %76 = vmatpush1.msra.mxu0 0.0
    %77 = vmatprep.subr.mxu0 0.0
    %78 = vmatpush1.msra.mxu0 0.0
    %79 = vmatprep.subr.mxu0 0.0
    %80 = vmatpush1.msra.mxu0 0.0
    %81 = vmatprep.subr.mxu0 0.0
    %82 = vmatpush1.msra.mxu0 0.0
    %83 = vmatprep.subr.mxu0 0.0
    %84 = vmatpush1.msra.mxu0 0.0
    %85 = vmatprep.subr.mxu0 0.0
    %86 = vmatpush1.msra.mxu0 0.0
    %87 = vmatprep.subr.mxu0 0.0
    %88 = vmatpush1.msra.mxu0 %v48
    %89 = vmatprep.subr.mxu0 0.0
    %90 = vmatpush1.msra.mxu0 %v47
    %91 = vmatprep.subr.mxu0 0.0
    %92 = vmatpush1.msra.mxu0 %v46
    %93 = vmatprep.subr.mxu0 0.0
    %94 = vmatpush1.msra.mxu0 %v45
    %95 = vmatprep.subr.mxu0 0.0
    %96 = vmatpush2.msra.mxu0 0.0
    %97 = vmatprep.subr.mxu0 0.0
    %98 = vmatpush2.msra.mxu0 0.0
    %99 = vmatprep.subr.mxu0 0.0
    %100 = vmatpush2.msra.mxu0 0.0
    %101 = vmatprep.subr.mxu0 0.0
    %102 = vmatpush2.msra.mxu0 0.0
    %103 = vmatprep.subr.mxu0 0.0
    %104 = vmatpush2.msra.mxu0 0.0
    %105 = vmatprep.subr.mxu0 0.0
    %106 = vmatpush2.msra.mxu0 0.0
    %107 = vmatprep.subr.mxu0 0.0
    %108 = vmatpush2.msra.mxu0 0.0
    %109 = vmatprep.subr.mxu0 0.0
    %110 = vmatpush2.msra.mxu0 0.0
    %111 = vmatprep.subr.mxu0 0.0
    %112 = vmatpush2.msra.mxu0 0.0
    %113 = vmatprep.subr.mxu0 0.0
    %114 = vmatpush2.msra.mxu0 0.0
    %115 = vmatprep.subr.mxu0 0.0
    %116 = vmatpush2.msra.mxu0 0.0
    %117 = vmatprep.subr.mxu0 0.0
    %118 = vmatpush2.msra.mxu0 0.0
    %119 = vmatprep.subr.mxu0 0.0
    %120 = vmatpush2.msra.mxu0 0.0
    %121 = vmatprep.subr.mxu0 0.0
    %122 = vmatpush2.msra.mxu0 0.0
    %123 = vmatprep.subr.mxu0 0.0
    %124 = vmatpush2.msra.mxu0 0.0
    %125 = vmatprep.subr.mxu0 0.0
    %126 = vmatpush2.msra.mxu0 0.0
    %127 = vmatprep.mubr.f32.mxu0 0.0
    %128 = vmatmul.mubr.f32.gmra.mxu0 %v58
    %v129 = vpop.f32.mrf.mxu0
    %v130 = vadd.f32 %v54, %v129
    %v131 = vpop.f32.mrf.mxu0
    %132 = vmatprep.mubr.f32.mxu0 0.0
    %133 = vmatmul.mubr.f32.gmra.mxu0 %v61
    %v134 = vpop.f32.mrf.mxu0
    %v135 = vadd.f32 %v54, %v134
    %v136 = vpop.f32.mrf.mxu0
    %137 = vdwg.mxu0
    %138 = vst [vmem:[#allocation7] sm:$0xff] %v130
    %139 = vst [vmem:[#allocation7 + $0x8] sm:$0xff] %v135
    // Predicated region
    $region22: #{tpu_custom_call.1} parent=1 // pred_check
      _
    $region23: #{tpu_custom_call.1} parent=1 // pred_check_branch
      %141 = sbr.rel (0) target = $region25
    $region24: #{tpu_custom_call.1} parent=1 // pred_region
      %s143 = ssub.s32 256, 256
      %144 = vsyncadd [#allocation4], %s143
      %s145 = sshll.u32 [#allocation7], 4
      %s146 = int_to_ptr.vmem [resolvable:$true] %s145
      %151 = dma.vmem_to_hbm [thread:$0]  %s146, 256, %s3, [#allocation4], 128, 128, 8
    $region25: #{tpu_custom_call.1} parent=1 // pred_fallthru
      _
    // Predicated region
    $region26: #{tpu_custom_call.1} parent=1 // pred_check
      _
    $region27: #{tpu_custom_call.1} parent=1 // pred_check_branch
      %153 = sbr.rel (0) target = $region29
    $region28: #{tpu_custom_call.1} parent=1 // pred_region
      %154 = dma.done [#allocation4], 256
    $region29: #{tpu_custom_call.1} parent=1 // pred_fallthru
      _
    %155 = vsyncpa [#allocation3], 1
    %156 = vsyncpa [#allocation6], 1
    %157 = vsyncpa [#allocation4], 1

</llo_original>
